<compile_context>
chip_gen: v7x
topology: tpu7x:2x2x1
jax: 0.10.0
libtpu: 0.0.40
codegen_flags: <defaults>
</compile_context>

<pallas_src>
import jax
import jax.numpy as jnp
from jax import lax
from jax.experimental import pallas as pl
from jax.experimental.pallas import tpu as pltpu


# ---------------------------------------------------------------------------
# Pass 1: fused QKV projection (one GEMM over x per token, not per q-tile)
# ---------------------------------------------------------------------------
def qkv_project_kernel(x_ref, w_ref, q_ref, k_ref, v_ref):
    H = q_ref.shape[-1]
    # One fused (tp, C) @ (C, 3H) matmul; operands in native dtype, f32 accumulate.
    qkv = jnp.dot(x_ref[0], w_ref[...], preferred_element_type=jnp.float32)
    scale = float(H) ** -0.5                      # fold 1/sqrt(H) into Q once
    q_ref[0] = (qkv[:, :H] * scale).astype(q_ref.dtype)
    k_ref[0] = qkv[:, H:2 * H].astype(k_ref.dtype)
    v_ref[0] = qkv[:, 2 * H:].astype(v_ref.dtype)


def qkv_project(x, w_qkv, *, tp=None):
    B, T, C = x.shape
    three_h = w_qkv.shape[1]
    assert three_h % 3 == 0
    H = three_h // 3

    if tp is None:
        # C/dtype-aware tile cap: keep the double-buffered (tp, C) x slab ~<= 4 MiB
        # so this pass fits v7x's scoped-VMEM default as well as v5e/v6e.
        row_bytes = C * x.dtype.itemsize
        cap = max(8, ((4 * 1024 * 1024) // (2 * row_bytes)) // 8 * 8)
        tp = min(T, 512, cap)
    assert T % tp == 0  # TODO(synk): ragged T needs masked tail handling

    out = jax.ShapeDtypeStruct((B, T, H), x.dtype)
    return pl.pallas_call(
        qkv_project_kernel,
        out_shape=(out, out, out),
        grid_spec=pltpu.PrefetchScalarGridSpec(
            num_scalar_prefetch=0,
            grid=(B, T // tp),
            in_specs=[
                pl.BlockSpec((1, tp, C), lambda b, i: (b, i, 0)),
                # fused [W_q|W_k|W_v]; constant index_map -> one DMA, stays resident.
                # TODO(synk): pipeline_mode=pl.Buffered(1) would reclaim the dead second
                # weight buffer when C*3H is multi-MiB (matters most on v7x).
                pl.BlockSpec((C, three_h), lambda b, i: (0, 0)),
            ],
            out_specs=[
                pl.BlockSpec((1, tp, H), lambda b, i: (b, i, 0)),
                pl.BlockSpec((1, tp, H), lambda b, i: (b, i, 0)),
                pl.BlockSpec((1, tp, H), lambda b, i: (b, i, 0)),
            ],
        ),
        compiler_params=pltpu.CompilerParams(
            dimension_semantics=("parallel", "parallel"),
            vmem_limit_bytes=32 * 1024 * 1024,
        ),
    )(x, w_qkv)


# ---------------------------------------------------------------------------
# Pass 2: flash-attention over pre-projected Q/K/V tiles
# ---------------------------------------------------------------------------
def head_flash_kernel(q_ref, k_ref, v_ref, o_ref, m_scr, l_scr, acc_scr):
    qi = pl.program_id(1)
    ki = pl.program_id(2)
    nk = pl.num_programs(2)

    TQ = q_ref.shape[1]
    TK = k_ref.shape[1]
    q_start = qi * TQ
    k_start = ki * TK

    # ---- first kv step for this (b, q-tile): init running stats
    @pl.when(ki == 0)
    def _():
        m_scr[...] = jnp.full_like(m_scr, -jnp.inf)
        l_scr[...] = jnp.zeros_like(l_scr)
        acc_scr[...] = jnp.zeros_like(acc_scr)

    # kv tiles entirely above the causal diagonal contribute nothing; their DMA is
    # also elided by the clamped kv index_map in the wrapper.
    interacts = k_start < q_start + TQ

    @pl.when(interacts)
    def _():
        q = q_ref[0]                               # (TQ, H), already scaled
        k = k_ref[0]
        v = v_ref[0]
        # q @ k^T without materializing a transpose of k
        s = lax.dot_general(q, k, (((1,), (1,)), ((), ())),
                            preferred_element_type=jnp.float32)       # (TQ, TK)

        def online_update(s_):
            m_prev = m_scr[...]
            m_new = jnp.maximum(m_prev, jnp.max(s_, axis=-1, keepdims=True))
            alpha = jnp.exp(m_prev - m_new)
            p = jnp.exp(s_ - m_new)
            l_scr[...] = alpha * l_scr[...] + jnp.sum(p, axis=-1, keepdims=True)
            acc_scr[...] = alpha * acc_scr[...] + jnp.dot(
                p.astype(v.dtype), v, preferred_element_type=jnp.float32)
            m_scr[...] = m_new

        # mask only needed when the tile crosses the diagonal
        crosses_diag = k_start + TK > q_start + 1

        @pl.when(crosses_diag)
        def _():
            # single relative iota (col - row) vs scalar offset: fewer VPU passes
            # than two absolute iotas + adds.
            rel = (lax.broadcasted_iota(jnp.int32, (TQ, TK), 1)
                   - lax.broadcasted_iota(jnp.int32, (TQ, TK), 0))
            online_update(jnp.where(rel <= q_start - k_start, s, -jnp.inf))

        @pl.when(jnp.logical_not(crosses_diag))
        def _():
            online_update(s)       # fully-causal tile: no where() at all

    # ---- last kv step: normalize once on (TQ, H) instead of dividing (TQ, TK)
    @pl.when(ki == nk - 1)
    def _():
        # Safe: ki==0 always interacts and column 0 is never masked, so l > 0 per row.
        # TODO(synk): pl.reciprocal(..., approx=True) would use the EUP approx path;
        # kept exact to stay within 1e-5 of the reference.
        inv_l = pl.reciprocal(l_scr[...], approx=False)
        o_ref[0] = (acc_scr[...] * inv_l).astype(o_ref.dtype)
    # TODO(synk): nn.Dropout on attention weights is identity in eval mode; not applied.


def flash_attention_causal(q, k, v, *, tq=None, tk=None):
    B, T, H = q.shape
    if tq is None:
        tq = min(T, 512)
    if tk is None:
        # larger kv tiles halve per-step grid overhead (esp. v5e); the (tq, tk) f32
        # score/p tiles are still only ~2 MiB each, well inside every gen's VMEM.
        tk = min(T, 1024)
    assert T % tq == 0 and T % tk == 0  # TODO(synk): ragged tails need masked loads

    def q_map(b, qi, ki):
        return (b, qi, 0)

    def kv_map(b, qi, ki):
        # DMA elision for causally-skipped tiles: clamp to the last interacting kv
        # block; Pallas skips the copy when the block index repeats.
        last = ((qi + 1) * tq - 1) // tk
        return (b, jnp.minimum(ki, last), 0)

    return pl.pallas_call(
        head_flash_kernel,
        out_shape=jax.ShapeDtypeStruct((B, T, H), q.dtype),
        grid_spec=pltpu.PrefetchScalarGridSpec(
            num_scalar_prefetch=0,
            grid=(B, T // tq, T // tk),
            in_specs=[
                pl.BlockSpec((1, tq, H), q_map),    # q tile resident across kv loop
                pl.BlockSpec((1, tk, H), kv_map),   # projected K stream
                pl.BlockSpec((1, tk, H), kv_map),   # projected V stream
            ],
            out_specs=pl.BlockSpec((1, tq, H), q_map),
            scratch_shapes=[
                pltpu.VMEM((tq, 1), jnp.float32),   # running max  m
                pltpu.VMEM((tq, 1), jnp.float32),   # running sum  l
                pltpu.VMEM((tq, H), jnp.float32),   # output accumulator
            ],
        ),
        compiler_params=pltpu.CompilerParams(
            dimension_semantics=("parallel", "parallel", "arbitrary"),
            vmem_limit_bytes=32 * 1024 * 1024,
        ),
        # TODO(synk): with H=16 the output store is only 16 lanes wide; fusing several
        # heads so the last dim is num_heads*H >= 128 would make writeback lane-dense
        # and fill the MXU K/N dims (out of scope for a single `Head`).
    )(q, k, v)


def head_forward(x, w_qkv, *, tq=None, tk=None, tp=None):
    """x: (B, T, C); w_qkv: (C, 3H) = [W_q | W_k | W_v], pre-transposed from PyTorch (H, C)."""
    q, k, v = qkv_project(x, w_qkv, tp=tp)
    return flash_attention_causal(q, k, v, tq=tq, tk=tk)


def head_reference(x, wq_t, wk_t, wv_t):
    """Pure-JAX reference matching the PyTorch forward (dropout in eval mode)."""
    k = x @ wk_t
    q = x @ wq_t
    v = x @ wv_t
    scale = k.shape[-1] ** -0.5
    wei = jnp.einsum("btd,bsd->bts", q, k) * scale
    T = x.shape[1]
    mask = jnp.tril(jnp.ones((T, T), dtype=bool))
    wei = jnp.where(mask[None], wei, -jnp.inf)
    wei = jax.nn.softmax(wei, axis=-1)
    return wei @ v


if __name__ == "__main__":
    # Hyperparameters implied by the module: n_embd (C), block_size >= T, head_size (H).
    B, T, n_embd, head_size = 2, 16, 32, 16

    key = jax.random.PRNGKey(0)
    kx, kq, kk, kv = jax.random.split(key, 4)

    x = jax.random.normal(kx, (B, T, n_embd), dtype=jnp.float32)

    # Deterministic init shaped like PyTorch nn.Linear(n_embd, head_size).weight = (H, C),
    # stored transposed as (C, H) and fused into (C, 3H) for the projection kernel.
    bound = 1.0 / (n_embd ** 0.5)
    wq_t = jax.random.uniform(kq, (n_embd, head_size), jnp.float32, -bound, bound)
    wk_t = jax.random.uniform(kk, (n_embd, head_size), jnp.float32, -bound, bound)
    wv_t = jax.random.uniform(kv, (n_embd, head_size), jnp.float32, -bound, bound)
    w_qkv = jnp.concatenate([wq_t, wk_t, wv_t], axis=1)          # (C, 3H)

    ref = head_reference(x, wq_t, wk_t, wv_t)

    # Tiled path: exercises the skipped / masked / unmasked kv-tile branches and the
    # clamped (DMA-eliding) kv index_map.
    out_tiled = jax.block_until_ready(head_forward(x, w_qkv, tq=8, tk=8, tp=8))
    # Single-tile path: whole sequence per grid step.
    out_full = jax.block_until_ready(head_forward(x, w_qkv))

    assert out_tiled.shape == (B, T, head_size)
    assert jnp.allclose(out_tiled, ref, atol=1e-5, rtol=1e-5), "tiled kernel mismatch vs reference"
    assert jnp.allclose(out_full, ref, atol=1e-5, rtol=1e-5), "full-tile kernel mismatch vs reference"

    print("KERNEL_OK")
</pallas_src>

<mosaic_0001>
module attributes {stable_mosaic.version = 11 : i64} {
  func.func @qkv_project_kernel(%arg0: i32, %arg1: i32, %arg2: memref<1x8x32xf32, #tpu.memory_space<vmem>>, %arg3: memref<32x48xf32, #tpu.memory_space<vmem>>, %arg4: memref<1x8x16xf32, #tpu.memory_space<vmem>>, %arg5: memref<1x8x16xf32, #tpu.memory_space<vmem>>, %arg6: memref<1x8x16xf32, #tpu.memory_space<vmem>>) attributes {dimension_semantics = [#tpu.dimension_semantics<parallel>, #tpu.dimension_semantics<parallel>], iteration_bounds = array<i64: 2, 2>, scalar_prefetch = 0 : i64, scratch_operands = 0 : i64, tpu.core_type = #tpu.core_type<tc>, window_params = [{transform_indices = @transform_0, window_bounds = array<i64: 1, 8, 32>}, {pipeline_mode = #tpu.pipeline_mode<synchronous>, transform_indices = @transform_1, window_bounds = array<i64: 32, 48>}, {transform_indices = @transform_2, window_bounds = array<i64: 1, 8, 16>}, {transform_indices = @transform_3, window_bounds = array<i64: 1, 8, 16>}, {transform_indices = @transform_4, window_bounds = array<i64: 1, 8, 16>}]} {
    %c0 = arith.constant 0 : index
    %c0_0 = arith.constant 0 : index
    %c0_1 = arith.constant 0 : index
    %0 = vector.load %arg2[%c0, %c0_0, %c0_1] : memref<1x8x32xf32, #tpu.memory_space<vmem>>, vector<1x8x32xf32>
    %1 = vector.shape_cast %0 : vector<1x8x32xf32> to vector<8x32xf32>
    %c0_2 = arith.constant 0 : index
    %c0_3 = arith.constant 0 : index
    %2 = vector.load %arg3[%c0_2, %c0_3] : memref<32x48xf32, #tpu.memory_space<vmem>>, vector<32x48xf32>
    %cst = arith.constant dense<0.000000e+00> : vector<8x48xf32>
    %3 = tpu.matmul %1, %2, %cst {dimension_numbers = #tpu.dot_dimension_numbers<[1], [0], [0], [1], [0, 0, 1, 1], [], []>} : vector<8x32xf32>, vector<32x48xf32>, vector<8x48xf32> -> vector<8x48xf32>
    %4 = vector.extract_strided_slice %3 {offsets = [0, 0], sizes = [8, 16], strides = [1, 1]} : vector<8x48xf32> to vector<8x16xf32>
    %cst_4 = arith.constant 2.500000e-01 : f32
    %5 = vector.broadcast %cst_4 : f32 to vector<8x16xf32>
    %6 = arith.mulf %4, %5 : vector<8x16xf32>
    %c0_5 = arith.constant 0 : index
    %c0_6 = arith.constant 0 : index
    %c0_7 = arith.constant 0 : index
    %7 = vector.load %arg4[%c0_5, %c0_6, %c0_7] : memref<1x8x16xf32, #tpu.memory_space<vmem>>, vector<1x8x16xf32>
    %8 = vector.shape_cast %7 : vector<1x8x16xf32> to vector<8x16xf32>
    %9 = vector.shape_cast %6 : vector<8x16xf32> to vector<1x8x16xf32>
    tpu.vector_store %arg4[%c0_5, %c0_6, %c0_7], %9 {strides = array<i32>} : memref<1x8x16xf32, #tpu.memory_space<vmem>>, vector<1x8x16xf32>,
    %10 = vector.extract_strided_slice %3 {offsets = [0, 16], sizes = [8, 16], strides = [1, 1]} : vector<8x48xf32> to vector<8x16xf32>
    %c0_8 = arith.constant 0 : index
    %c0_9 = arith.constant 0 : index
    %c0_10 = arith.constant 0 : index
    %11 = vector.load %arg5[%c0_8, %c0_9, %c0_10] : memref<1x8x16xf32, #tpu.memory_space<vmem>>, vector<1x8x16xf32>
    %12 = vector.shape_cast %11 : vector<1x8x16xf32> to vector<8x16xf32>
    %13 = vector.shape_cast %10 : vector<8x16xf32> to vector<1x8x16xf32>
    tpu.vector_store %arg5[%c0_8, %c0_9, %c0_10], %13 {strides = array<i32>} : memref<1x8x16xf32, #tpu.memory_space<vmem>>, vector<1x8x16xf32>,
    %14 = vector.extract_strided_slice %3 {offsets = [0, 32], sizes = [8, 16], strides = [1, 1]} : vector<8x48xf32> to vector<8x16xf32>
    %c0_11 = arith.constant 0 : index
    %c0_12 = arith.constant 0 : index
    %c0_13 = arith.constant 0 : index
    %15 = vector.load %arg6[%c0_11, %c0_12, %c0_13] : memref<1x8x16xf32, #tpu.memory_space<vmem>>, vector<1x8x16xf32>
    %16 = vector.shape_cast %15 : vector<1x8x16xf32> to vector<8x16xf32>
    %17 = vector.shape_cast %14 : vector<8x16xf32> to vector<1x8x16xf32>
    tpu.vector_store %arg6[%c0_11, %c0_12, %c0_13], %17 {strides = array<i32>} : memref<1x8x16xf32, #tpu.memory_space<vmem>>, vector<1x8x16xf32>,
    return
  }
  func.func @transform_0(%arg0: i32, %arg1: i32) -> (i32, i32, i32) {
    %c0_i32 = arith.constant 0 : i32
    %c0_i32_0 = arith.constant 0 : i32
    return %arg0, %arg1, %c0_i32 : i32, i32, i32
  }
  func.func @transform_1(%arg0: i32, %arg1: i32) -> (i32, i32) {
    %c0_i32 = arith.constant 0 : i32
    %c0_i32_0 = arith.constant 0 : i32
    %c0_i32_1 = arith.constant 0 : i32
    return %c0_i32, %c0_i32_0 : i32, i32
  }
  func.func @transform_2(%arg0: i32, %arg1: i32) -> (i32, i32, i32) {
    %c0_i32 = arith.constant 0 : i32
    %c0_i32_0 = arith.constant 0 : i32
    return %arg0, %arg1, %c0_i32 : i32, i32, i32
  }
  func.func @transform_3(%arg0: i32, %arg1: i32) -> (i32, i32, i32) {
    %c0_i32 = arith.constant 0 : i32
    %c0_i32_0 = arith.constant 0 : i32
    return %arg0, %arg1, %c0_i32 : i32, i32, i32
  }
  func.func @transform_4(%arg0: i32, %arg1: i32) -> (i32, i32, i32) {
    %c0_i32 = arith.constant 0 : i32
    %c0_i32_0 = arith.constant 0 : i32
    return %arg0, %arg1, %c0_i32 : i32, i32, i32
  }
}

</mosaic_0001>

<llo_original>
// kernel: tpu_custom_call.1
$region0: #{tpu_custom_call.1}
  #allocation0 [shape = 'u32[]', space=smem, size = 0x4, offset = 0x4, fixed_abs, tag = 'smem constant byte address 0x4 - core index']
  #allocation1 [shape = 'u32[144,128]{1,0:T(1,128)}', space=vmem, size = 0x12000, scoped, tag = 'internal scratch']
  %s0 = inlined_call_operand.hbm [shape: f32[2,16,32], index: 0, kind: input, shape index: {}]
  %s1 = inlined_call_operand.hbm [shape: f32[32,48], index: 1, kind: input, shape index: {}]
  %s2 = inlined_call_operand.hbm [shape: f32[2,16,16], index: 2, kind: output, shape index: {0}]
  %s3 = inlined_call_operand.hbm [shape: f32[2,16,16], index: 3, kind: output, shape index: {1}]
  %s4 = inlined_call_operand.hbm [shape: f32[2,16,16], index: 4, kind: output, shape index: {2}]
  %5 = xla_tuple %s2, %s3, %s4
  %s6 = sld [smem:[#allocation0]]
  $region65: #{tpu_custom_call.1} parent=0
    _
  %s8 = ssub.s32 1, %s6
  %s9 = scalar_select 0, %s8, %s6
  $region1: #{tpu_custom_call.1} parent=0
    #allocation2 [shape = 'u8[8192]{0}', space=vmem, size = 0x2000, scoped, tag = 'input window, operand 0']
    #allocation3 [shape = 's32[2]{0}', space=sflag, size = 0x8, scoped, tag = 'scoped memory for tpu_custom_call.1']
    #allocation4 [shape = 's32[2]{0}', space=sflag, size = 0x8, scoped, tag = 'scoped memory for tpu_custom_call.1']
    #allocation5 [shape = 'u8[16384]{0}', space=vmem, size = 0x4000, scoped, tag = 'input window, operand 1, single buffered']
    #allocation6 [shape = 's32[1]{0}', space=sflag, size = 0x4, scoped, tag = 'scoped memory for tpu_custom_call.1']
    #allocation7 [shape = 'u8[8192]{0}', space=vmem, size = 0x2000, scoped, tag = 'output window, operand 0']
    #allocation8 [shape = 'u8[8192]{0}', space=vmem, size = 0x2000, scoped, tag = 'output window, operand 1']
    #allocation9 [shape = 's32[2]{0}', space=sflag, size = 0x8, scoped, tag = 'scoped memory for tpu_custom_call.1']
    #allocation10 [shape = 'u8[8192]{0}', space=vmem, size = 0x2000, scoped, tag = 'output window, operand 2']
    %10 = vsyncpa [#allocation3], 0
    %s11 = scalar_lea.sflag [#allocation3], 1
    %12 = vsyncpa %s11, 0
    %13 = vsyncpa [#allocation6], 0
    %14 = vsyncpa [#allocation4], 0
    %s15 = scalar_lea.sflag [#allocation4], 1
    %16 = vsyncpa %s15, 0
    %17 = vsyncpa [#allocation9], 0
    %s18 = scalar_lea.sflag [#allocation9], 1
    %19 = vsyncpa %s18, 0
    loop: start=0, step=1, limit=6
    $region2: #{tpu_custom_call.1} parent=1 // loop_pre_header
      _
    $region3: #{tpu_custom_call.1} parent=1 // loop_header
      %s21 = sphi 0, %s25
      %p22 = scmp.ge.s32.totalorder %s21, 6
      %s28 = sphi 0, %s40
      %s29 = sphi 0, %s36
      %s30 = sphi 0, %s28
      %s31 = sphi 0, %s29
      %s32 = sphi 0, %s30
      %s33 = sphi 0, %s31
      %s45 = sphi 0, %s47
      %s48 = sphi 0, %s45
      %s49 = sphi 0, %s48
      %s65 = sphi 0, %s49
      %s69 = sphi 0, %s69
      %s71 = sphi 0, %s69
      %s72 = sphi 0, %s71
      %s86 = sphi 0, %s72
      %s94 = sphi 0, %s96
      %s97 = sphi 0, %s94
      %s98 = sphi 0, %s97
      %s114 = sphi 0, %s98
      %s122 = sphi 0, %s124
      %s125 = sphi 0, %s122
      %s126 = sphi 0, %s125
      %s142 = sphi 0, %s126
      %s150 = sphi 0, %s152
      %s153 = sphi 0, %s150
      %s154 = sphi 0, %s153
      %s170 = sphi 0, %s154
    $region4: #{tpu_custom_call.1} parent=1 // loop_header_branch
      %24 = sbr.rel (%p22) target = $region8
    $region5: #{tpu_custom_call.1} parent=1 // loop_body
      %s26 = ssub.s32 %s21, 1
      %s27 = ssub.s32 %s21, 2
      %s34 = sadd.s32 1, %s29
      %p35 = scmp.ge.s32.totalorder %s34, 2
      %s36 = scalar_select %p35, 0, %s34
      %s37 = sadd.s32 1, %s28
      %s38 = scalar_select %p35, %s37, %s28
      %p39 = scmp.ge.s32.totalorder %s38, 2
      %s40 = scalar_select %p39, 0, %s38
      %s41 = ssub.s32 %s28, %s40
      %s42 = ssub.s32 %s29, %s36
      %s43 = sor.u32 %s41, %s42
      %p44 = scmp.eq.s32.totalorder %s43, 0
      %s46 = sadd.s32 %s45, 1
      %s47 = scalar_select %p44, %s45, %s46
      %p50 = pneg %p44
      %p51 = scmp.eq.s32.totalorder %s21, 3
      %p52 = por %p50, %p51
      %p53 = scmp.ne.s32.totalorder %s45, %s48
      %p54 = scmp.eq.s32.totalorder %s21, 0
      %p55 = por %p53, %p54
      %p56 = scmp.ne.s32.totalorder %s45, %s48
      %p57 = scmp.eq.s32.totalorder %s26, 3
      %p58 = por %p56, %p57
      %p59 = scmp.ne.s32.totalorder %s48, %s49
      %p60 = scmp.eq.s32.totalorder %s26, 0
      %p61 = por %p59, %p60
      %p62 = scmp.ne.s32.totalorder %s48, %s49
      %p63 = scmp.eq.s32.totalorder %s27, 3
      %p64 = por %p62, %p63
      %p66 = scmp.ne.s32.totalorder %s49, %s65
      %p67 = scmp.eq.s32.totalorder %s27, 0
      %p68 = por %p66, %p67
      %s70 = sadd.s32 %s69, 1
      %p73 = scmp.eq.s32.totalorder %s21, 3
      %p74 = scmp.ne.s32.totalorder %s69, %s71
      %p75 = scmp.eq.s32.totalorder %s21, 0
      %p76 = por %p74, %p75
      %p77 = scmp.ne.s32.totalorder %s69, %s71
      %p78 = scmp.eq.s32.totalorder %s26, 3
      %p79 = por %p77, %p78
      %p80 = scmp.ne.s32.totalorder %s71, %s72
      %p81 = scmp.eq.s32.totalorder %s26, 0
      %p82 = por %p80, %p81
      %p83 = scmp.ne.s32.totalorder %s71, %s72
      %p84 = scmp.eq.s32.totalorder %s27, 3
      %p85 = por %p83, %p84
      %p87 = scmp.ne.s32.totalorder %s72, %s86
      %p88 = scmp.eq.s32.totalorder %s27, 0
      %p89 = por %p87, %p88
      %s90 = ssub.s32 %s28, %s40
      %s91 = ssub.s32 %s29, %s36
      %s92 = sor.u32 %s90, %s91
      %p93 = scmp.eq.s32.totalorder %s92, 0
      %s95 = sadd.s32 %s94, 1
      %s96 = scalar_select %p93, %s94, %s95
      %p99 = pneg %p93
      %p100 = scmp.eq.s32.totalorder %s21, 3
      %p101 = por %p99, %p100
      %p102 = scmp.ne.s32.totalorder %s94, %s97
      %p103 = scmp.eq.s32.totalorder %s21, 0
      %p104 = por %p102, %p103
      %p105 = scmp.ne.s32.totalorder %s94, %s97
      %p106 = scmp.eq.s32.totalorder %s26, 3
      %p107 = por %p105, %p106
      %p108 = scmp.ne.s32.totalorder %s97, %s98
      %p109 = scmp.eq.s32.totalorder %s26, 0
      %p110 = por %p108, %p109
      %p111 = scmp.ne.s32.totalorder %s97, %s98
      %p112 = scmp.eq.s32.totalorder %s27, 3
      %p113 = por %p111, %p112
      %p115 = scmp.ne.s32.totalorder %s98, %s114
      %p116 = scmp.eq.s32.totalorder %s27, 0
      %p117 = por %p115, %p116
      %s118 = ssub.s32 %s28, %s40
      %s119 = ssub.s32 %s29, %s36
      %s120 = sor.u32 %s118, %s119
      %p121 = scmp.eq.s32.totalorder %s120, 0
      %s123 = sadd.s32 %s122, 1
      %s124 = scalar_select %p121, %s122, %s123
      %p127 = pneg %p121
      %p128 = scmp.eq.s32.totalorder %s21, 3
      %p129 = por %p127, %p128
      %p130 = scmp.ne.s32.totalorder %s122, %s125
      %p131 = scmp.eq.s32.totalorder %s21, 0
      %p132 = por %p130, %p131
      %p133 = scmp.ne.s32.totalorder %s122, %s125
      %p134 = scmp.eq.s32.totalorder %s26, 3
      %p135 = por %p133, %p134
      %p136 = scmp.ne.s32.totalorder %s125, %s126
      %p137 = scmp.eq.s32.totalorder %s26, 0
      %p138 = por %p136, %p137
      %p139 = scmp.ne.s32.totalorder %s125, %s126
      %p140 = scmp.eq.s32.totalorder %s27, 3
      %p141 = por %p139, %p140
      %p143 = scmp.ne.s32.totalorder %s126, %s142
      %p144 = scmp.eq.s32.totalorder %s27, 0
      %p145 = por %p143, %p144
      %s146 = ssub.s32 %s28, %s40
      %s147 = ssub.s32 %s29, %s36
      %s148 = sor.u32 %s146, %s147
      %p149 = scmp.eq.s32.totalorder %s148, 0
      %s151 = sadd.s32 %s150, 1
      %s152 = scalar_select %p149, %s150, %s151
      %p155 = pneg %p149
      %p156 = scmp.eq.s32.totalorder %s21, 3
      %p157 = por %p155, %p156
      %p158 = scmp.ne.s32.totalorder %s150, %s153
      %p159 = scmp.eq.s32.totalorder %s21, 0
      %p160 = por %p158, %p159
      %p161 = scmp.ne.s32.totalorder %s150, %s153
      %p162 = scmp.eq.s32.totalorder %s26, 3
      %p163 = por %p161, %p162
      %p164 = scmp.ne.s32.totalorder %s153, %s154
      %p165 = scmp.eq.s32.totalorder %s26, 0
      %p166 = por %p164, %p165
      %p167 = scmp.ne.s32.totalorder %s153, %s154
      %p168 = scmp.eq.s32.totalorder %s27, 3
      %p169 = por %p167, %p168
      %p171 = scmp.ne.s32.totalorder %s154, %s170
      %p172 = scmp.eq.s32.totalorder %s27, 0
      %p173 = por %p171, %p172
      %p174 = scmp.le.s32.totalorder 1, %s21
      %p175 = scmp.lt.s32.totalorder %s21, 5
      %p176 = pnand %p174, %p175
      %p177 = pneg %p176
      // Predicated region
      $region9: #{tpu_custom_call.1} parent=5 // pred_check
        _
      $region10: #{tpu_custom_call.1} parent=5 // pred_check_branch
        %179 = sbr.rel (%p176) target = $region12
      $region11: #{tpu_custom_call.1} parent=5 // pred_region
        %s180 = ssub.s32 %s21, 1
        // Predicated region
        $region13: #{tpu_custom_call.1} parent=11 // pred_check
          %p181 = pneg %p82
        $region14: #{tpu_custom_call.1} parent=11 // pred_check_branch
          %183 = sbr.rel (%p181) target = $region16
        $region15: #{tpu_custom_call.1} parent=11 // pred_region
          %s185 = ssub.s32 512, 512
          %186 = vsyncadd [#allocation6], %s185
          %s187 = sshll.u32 [#allocation5], 4
          %s188 = int_to_ptr.vmem [resolvable:$true] %s187
          %193 = dma.hbm_to_vmem [thread:$0]  %s1, 512, %s188, [#allocation6], 128, 128, 8
        $region16: #{tpu_custom_call.1} parent=11 // pred_fallthru
          _
      $region12: #{tpu_custom_call.1} parent=5 // pred_fallthru
        _
      %p194 = scmp.lt.s32.totalorder %s21, 4
      // Predicated region
      $region17: #{tpu_custom_call.1} parent=5 // pred_check
        %p195 = pneg %p194
      $region18: #{tpu_custom_call.1} parent=5 // pred_check_branch
        %197 = sbr.rel (%p195) target = $region20
      $region19: #{tpu_custom_call.1} parent=5 // pred_region
        // Predicated region
        $region21: #{tpu_custom_call.1} parent=19 // pred_check
          %p198 = pneg %p55
        $region22: #{tpu_custom_call.1} parent=19 // pred_check_branch
          %200 = sbr.rel (%p198) target = $region24
        $region23: #{tpu_custom_call.1} parent=19 // pred_region
          %s201 = sand.u32 %s45, 1
          %s202 = scalar_lea.sflag [#allocation3], %s201
          %s203 = sand.u32 %s45, 1
          %s204 = smul.addr %s203, 8
          %s205 = scalar_lea.vmem [#allocation2], %s204
          %s207 = ssub.s32 128, 128
          %208 = vsyncadd %s202, %s207
          %s209 = smul.addr %s28, 2
          %s210 = sadd.s32 %s29, %s209
          %s211 = smul.addr %s210, 128
          %s212 = scalar_lea.hbm %s0, %s211
          %s214 = sshll.u32 %s205, 4
          %s215 = int_to_ptr.vmem [resolvable:$true] %s214
          %217 = dma.hbm_to_vmem [thread:$0]  %s212, 128, %s215, %s202
        $region24: #{tpu_custom_call.1} parent=19 // pred_fallthru
          _
      $region20: #{tpu_custom_call.1} parent=5 // pred_fallthru
        _
      %p218 = scmp.le.s32.totalorder 1, %s21
      %p219 = scmp.lt.s32.totalorder %s21, 5
      %p220 = pnand %p218, %p219
      %p221 = pneg %p220
      // Predicated region
      $region25: #{tpu_custom_call.1} parent=5 // pred_check
        _
      $region26: #{tpu_custom_call.1} parent=5 // pred_check_branch
        %223 = sbr.rel (%p220) target = $region28
      $region27: #{tpu_custom_call.1} parent=5 // pred_region
        %s224 = ssub.s32 %s21, 1
        %s225 = sand.u32 %s48, 1
        %s226 = scalar_lea.sflag [#allocation3], %s225
        %s227 = sand.u32 %s48, 1
        %s228 = smul.addr %s227, 8
        %s229 = scalar_lea.vmem [#allocation2], %s228
        // Predicated region
        $region29: #{tpu_custom_call.1} parent=27 // pred_check
          %p230 = pneg %p61
        $region30: #{tpu_custom_call.1} parent=27 // pred_check_branch
          %232 = sbr.rel (%p230) target = $region32
        $region31: #{tpu_custom_call.1} parent=27 // pred_region
          %233 = dma.done %s226, 128
        $region32: #{tpu_custom_call.1} parent=27 // pred_fallthru
          _
        // Predicated region
        $region33: #{tpu_custom_call.1} parent=27 // pred_check
          %p234 = pneg %p82
        $region34: #{tpu_custom_call.1} parent=27 // pred_check_branch
          %236 = sbr.rel (%p234) target = $region36
        $region35: #{tpu_custom_call.1} parent=27 // pred_region
          %237 = dma.done [#allocation6], 512
        $region36: #{tpu_custom_call.1} parent=27 // pred_fallthru
          _
        %s238 = sand.u32 %s48, 1
        %s239 = scalar_lea.sflag [#allocation3], %s238
        %s240 = sand.u32 %s48, 1
        %s241 = smul.addr %s240, 8
        %s242 = scalar_lea.vmem [#allocation2], %s241
        %p243 = pneg %p61
        %p244 = pneg %p58
        %p245 = pneg %p82
        %p246 = pneg %p79
        %p247 = pneg %p110
        %p248 = pneg %p107
        %s249 = sand.u32 %s97, 1
        %s250 = scalar_lea.sflag [#allocation4], %s249
        %s251 = sand.u32 %s97, 1
        %s252 = smul.addr %s251, 8
        %s253 = scalar_lea.vmem [#allocation7], %s252
        %p254 = pneg %p138
        %p255 = pneg %p135
        %s256 = sand.u32 %s26, 1
        %s257 = scalar_lea.sflag [#allocation9], %s256
        %s258 = sand.u32 %s125, 1
        %s259 = smul.addr %s258, 8
        %s260 = scalar_lea.vmem [#allocation8], %s259
        %p261 = pneg %p166
        %p262 = pneg %p163
        %s263 = sand.u32 %s26, 1
        %s264 = scalar_lea.sflag [#allocation9], %s263
        %s265 = sand.u32 %s153, 1
        %s266 = smul.addr %s265, 8
        %s267 = scalar_lea.vmem [#allocation10], %s266
        %v268 = vld [vmem:[%s229] sm:$0xff]
        %v269 = vld [vmem:[#allocation5] sm:$0xff]
        %v270 = vld [vmem:[#allocation5 + $0x8] sm:$0xff]
        %v271 = vld [vmem:[#allocation5 + $0x10] sm:$0xff]
        %v272 = vld [vmem:[#allocation5 + $0x18] sm:$0xff]
        %vm273 = vcmask 261120
        %v275 = vsel %vm273, %v268, 0
        %277 = vmatprep.subr.mxu0 0.0
        %278 = vmatpush1.msra.mxu0 %v269
        %279 = vmatprep.subr.mxu0 0.0
        %280 = vmatpush1.msra.mxu0 %v270
        %281 = vmatprep.subr.mxu0 0.0
        %282 = vmatpush1.msra.mxu0 %v271
        %283 = vmatprep.subr.mxu0 0.0
        %284 = vmatpush1.msra.mxu0 %v272
        %285 = vmatprep.subr.mxu0 0.0
        %286 = vmatpush1.msra.mxu0 0.0
        %287 = vmatprep.subr.mxu0 0.0
        %288 = vmatpush1.msra.mxu0 0.0
        %289 = vmatprep.subr.mxu0 0.0
        %290 = vmatpush1.msra.mxu0 0.0
        %291 = vmatprep.subr.mxu0 0.0
        %292 = vmatpush1.msra.mxu0 0.0
        %293 = vmatprep.subr.mxu0 0.0
        %294 = vmatpush1.msra.mxu0 0.0
        %295 = vmatprep.subr.mxu0 0.0
        %296 = vmatpush1.msra.mxu0 0.0
        %297 = vmatprep.subr.mxu0 0.0
        %298 = vmatpush1.msra.mxu0 0.0
        %299 = vmatprep.subr.mxu0 0.0
        %300 = vmatpush1.msra.mxu0 0.0
        %301 = vmatprep.subr.mxu0 0.0
        %302 = vmatpush1.msra.mxu0 0.0
        %303 = vmatprep.subr.mxu0 0.0
        %304 = vmatpush1.msra.mxu0 0.0
        %305 = vmatprep.subr.mxu0 0.0
        %306 = vmatpush1.msra.mxu0 0.0
        %307 = vmatprep.subr.mxu0 0.0
        %308 = vmatpush1.msra.mxu0 0.0
        %309 = vmatprep.subr.mxu0 0.0
        %310 = vmatpush1.msra.mxu0 0.0
        %311 = vmatprep.subr.mxu0 0.0
        %312 = vmatpush1.msra.mxu0 0.0
        %313 = vmatprep.subr.mxu0 0.0
        %314 = vmatpush1.msra.mxu0 0.0
        %315 = vmatprep.subr.mxu0 0.0
        %316 = vmatpush1.msra.mxu0 0.0
        %317 = vmatprep.subr.mxu0 0.0
        %318 = vmatpush1.msra.mxu0 0.0
        %319 = vmatprep.subr.mxu0 0.0
        %320 = vmatpush1.msra.mxu0 0.0
        %321 = vmatprep.subr.mxu0 0.0
        %322 = vmatpush1.msra.mxu0 0.0
        %323 = vmatprep.subr.mxu0 0.0
        %324 = vmatpush1.msra.mxu0 0.0
        %325 = vmatprep.subr.mxu0 0.0
        %326 = vmatpush1.msra.mxu0 0.0
        %327 = vmatprep.subr.mxu0 0.0
        %328 = vmatpush1.msra.mxu0 0.0
        %329 = vmatprep.subr.mxu0 0.0
        %330 = vmatpush1.msra.mxu0 0.0
        %331 = vmatprep.subr.mxu0 0.0
        %332 = vmatpush1.msra.mxu0 0.0
        %333 = vmatprep.subr.mxu0 0.0
        %334 = vmatpush1.msra.mxu0 0.0
        %335 = vmatprep.subr.mxu0 0.0
        %336 = vmatpush1.msra.mxu0 0.0
        %337 = vmatprep.subr.mxu0 0.0
        %338 = vmatpush1.msra.mxu0 0.0
        %339 = vmatprep.subr.mxu0 0.0
        %340 = vmatpush1.msra.mxu0 0.0
        %341 = vmatprep.mubr.f32.mxu0 0.0
        %342 = vmatmul.mubr.f32.gmra.mrb[0].mxu0 %v275
        %v343 = vpop.f32.mrb[0].mxu0
        %v344 = vadd.f32 0.0, %v343
        %v345 = vpop.f32.mrb[0].mxu0
        %346 = vdwg.mxu0
        %v347 = vmul.f32 %v344, 0.25
        %vm348 = vcmask 130048
        %349 = vst.msk [vmem:[%s253] sm:$0xff] %vm348, %v347
        %351 = vrot.lane.b32.xlu0 %v344, 112
        %v352 = vpop.permute.xlu0 %351
        %354 = vst.msk [vmem:[%s260] sm:$0xff] %vm348, %v352
        %355 = vrot.lane.b32.xlu0 %v344, 96
        %v356 = vpop.permute.xlu0 %355
        %358 = vst.msk [vmem:[%s267] sm:$0xff] %vm348, %v356
        %s359 = sand.u32 %s97, 1
        %s360 = scalar_lea.sflag [#allocation4], %s359
        %s361 = sand.u32 %s97, 1
        %s362 = smul.addr %s361, 8
        %s363 = scalar_lea.vmem [#allocation7], %s362
        %s364 = sand.u32 %s26, 1
        %s365 = scalar_lea.sflag [#allocation9], %s364
        %s366 = sand.u32 %s125, 1
        %s367 = smul.addr %s366, 8
        %s368 = scalar_lea.vmem [#allocation8], %s367
        %s369 = sand.u32 %s26, 1
        %s370 = scalar_lea.sflag [#allocation9], %s369
        %s371 = sand.u32 %s153, 1
        %s372 = smul.addr %s371, 8
        %s373 = scalar_lea.vmem [#allocation10], %s372
        // Predicated region
        $region37: #{tpu_custom_call.1} parent=27 // pred_check
          %p374 = pneg %p107
        $region38: #{tpu_custom_call.1} parent=27 // pred_check_branch
          %376 = sbr.rel (%p374) target = $region40
        $region39: #{tpu_custom_call.1} parent=27 // pred_region
          %s378 = ssub.s32 128, 128
          %379 = vsyncadd %s360, %s378
          %s380 = smul.addr %s30, 2
          %s381 = sadd.s32 %s31, %s380
          %s382 = smul.addr %s381, 128
          %s383 = scalar_lea.hbm %s2, %s382
          %s385 = sshll.u32 %s363, 4
          %s386 = int_to_ptr.vmem [resolvable:$true] %s385
          %388 = dma.vmem_to_hbm [thread:$0]  %s386, 128, %s383, %s360
        $region40: #{tpu_custom_call.1} parent=27 // pred_fallthru
          _
        // Predicated region
        $region41: #{tpu_custom_call.1} parent=27 // pred_check
          %p389 = pneg %p135
        $region42: #{tpu_custom_call.1} parent=27 // pred_check_branch
          %391 = sbr.rel (%p389) target = $region44
        $region43: #{tpu_custom_call.1} parent=27 // pred_region
          %s393 = ssub.s32 128, 128
          %394 = vsyncadd %s365, %s393
          %s395 = smul.addr %s30, 2
          %s396 = sadd.s32 %s31, %s395
          %s397 = smul.addr %s396, 128
          %s398 = scalar_lea.hbm %s3, %s397
          %s400 = sshll.u32 %s368, 4
          %s401 = int_to_ptr.vmem [resolvable:$true] %s400
          %403 = dma.vmem_to_hbm [thread:$0]  %s401, 128, %s398, %s365
        $region44: #{tpu_custom_call.1} parent=27 // pred_fallthru
          _
        // Predicated region
        $region45: #{tpu_custom_call.1} parent=27 // pred_check
          %p404 = pneg %p163
        $region46: #{tpu_custom_call.1} parent=27 // pred_check_branch
          %406 = sbr.rel (%p404) target = $region48
        $region47: #{tpu_custom_call.1} parent=27 // pred_region
          %s408 = ssub.s32 128, 128
          %409 = vsyncadd %s370, %s408
          %s410 = smul.addr %s30, 2
          %s411 = sadd.s32 %s31, %s410
          %s412 = smul.addr %s411, 128
          %s413 = scalar_lea.hbm %s4, %s412
          %s415 = sshll.u32 %s373, 4
          %s416 = int_to_ptr.vmem [resolvable:$true] %s415
          %418 = dma.vmem_to_hbm [thread:$0]  %s416, 128, %s413, %s370
        $region48: #{tpu_custom_call.1} parent=27 // pred_fallthru
          _
      $region28: #{tpu_custom_call.1} parent=5 // pred_fallthru
        _
      %p419 = scmp.le.s32.totalorder 2, %s21
      // Predicated region
      $region49: #{tpu_custom_call.1} parent=5 // pred_check
        %p420 = pneg %p419
      $region50: #{tpu_custom_call.1} parent=5 // pred_check_branch
        %422 = sbr.rel (%p420) target = $region52
      $region51: #{tpu_custom_call.1} parent=5 // pred_region
        %s423 = ssub.s32 %s21, 2
        // Predicated region
        $region53: #{tpu_custom_call.1} parent=51 // pred_check
          %p424 = pneg %p113
        $region54: #{tpu_custom_call.1} parent=51 // pred_check_branch
          %426 = sbr.rel (%p424) target = $region56
        $region55: #{tpu_custom_call.1} parent=51 // pred_region
          %s427 = sand.u32 %s98, 1
          %s428 = scalar_lea.sflag [#allocation4], %s427
          %s429 = sand.u32 %s98, 1
          %s430 = smul.addr %s429, 8
          %s431 = scalar_lea.vmem [#allocation7], %s430
          %432 = dma.done %s428, 128
        $region56: #{tpu_custom_call.1} parent=51 // pred_fallthru
          _
        // Predicated region
        $region57: #{tpu_custom_call.1} parent=51 // pred_check
          %p433 = pneg %p141
        $region58: #{tpu_custom_call.1} parent=51 // pred_check_branch
          %435 = sbr.rel (%p433) target = $region60
        $region59: #{tpu_custom_call.1} parent=51 // pred_region
          %s436 = sand.u32 %s27, 1
          %s437 = scalar_lea.sflag [#allocation9], %s436
          %s438 = sand.u32 %s126, 1
          %s439 = smul.addr %s438, 8
          %s440 = scalar_lea.vmem [#allocation8], %s439
          %441 = dma.done %s437, 128
        $region60: #{tpu_custom_call.1} parent=51 // pred_fallthru
          _
        // Predicated region
        $region61: #{tpu_custom_call.1} parent=51 // pred_check
          %p442 = pneg %p169
        $region62: #{tpu_custom_call.1} parent=51 // pred_check_branch
          %444 = sbr.rel (%p442) target = $region64
        $region63: #{tpu_custom_call.1} parent=51 // pred_region
          %s445 = sand.u32 %s27, 1
          %s446 = scalar_lea.sflag [#allocation9], %s445
          %s447 = sand.u32 %s154, 1
          %s448 = smul.addr %s447, 8
          %s449 = scalar_lea.vmem [#allocation10], %s448
          %450 = dma.done %s446, 128
        $region64: #{tpu_custom_call.1} parent=51 // pred_fallthru
          _
      $region52: #{tpu_custom_call.1} parent=5 // pred_fallthru
        _
    $region6: #{tpu_custom_call.1} parent=1 // loop_footer
      %s25 = sadd.s32 1, %s21
    $region7: #{tpu_custom_call.1} parent=1 // loop_footer_branch
      %20 = sbr.rel target = $region3
    $region8: #{tpu_custom_call.1} parent=1 // loop_exit
      _
    %451 = vsyncpa [#allocation3], 1
    %s452 = scalar_lea.sflag [#allocation3], 1
    %453 = vsyncpa %s452, 1
    %454 = vsyncpa [#allocation6], 1
    %455 = vsyncpa [#allocation4], 1
    %s456 = scalar_lea.sflag [#allocation4], 1
    %457 = vsyncpa %s456, 1
    %458 = vsyncpa [#allocation9], 1
    %s459 = scalar_lea.sflag [#allocation9], 1
    %460 = vsyncpa %s459, 1

</llo_original>
